<compile_context>
chip_gen: v5e
topology: v5e:2x2
jax: 0.10.0
libtpu: 0.0.40
codegen_flags: <defaults>
</compile_context>

<pallas_src>
import functools

import jax
import jax.numpy as jnp
from jax.experimental import pallas as pl
from jax.experimental.pallas import tpu as pltpu


# ------------------------------- helpers -------------------------------------
def _round_up(x, m):
    return (x + m - 1) // m * m


def _pick_tile(dim, preferred=256):
    """Largest MXU-friendly tile (256 then 128) dividing a 128-padded dim."""
    for t in (preferred, 128):
        if dim >= t and dim % t == 0:
            return t
    return dim


# Keep well under every chip's default scoped-VMEM limit (v5e: 16 MiB).
_SMALL_PATH_VMEM_BUDGET = 12 * 1024 * 1024


def _small_path_vmem_bytes(n_pad, dims_p):
    """Rough VMEM estimate for the fully fused whole-stack kernel."""
    max_c = max(dims_p)
    b = 2 * n_pad * n_pad * 2              # adjacency (bf16, double-buffered)
    b += 2 * n_pad * dims_p[0] * 2         # X (bf16)
    for i in range(len(dims_p) - 1):
        b += 2 * dims_p[i] * dims_p[i + 1] * 2   # W (bf16)
        b += 2 * dims_p[i + 1] * 4               # bias (f32)
    b += 2 * n_pad * dims_p[-1] * 4        # output (f32)
    b += 3 * n_pad * max_c * 4             # allowance for live intermediates
    return b


# -------- Fast path: whole GMFB stack fused into one pallas_call -------------
def _fused_stack_kernel(*refs, num_layers):
    # refs = (a_ref, x_ref, w0, b0, w1, b1, ..., o_ref)
    a_ref, x_ref = refs[0], refs[1]
    o_ref = refs[-1]
    wb = refs[2:-1]

    a = a_ref[...]                                  # bf16 weighted adjacency
    h = x_ref[...]                                  # bf16 node features
    out = None
    for li in range(num_layers):                    # unrolled at trace time
        w = wb[2 * li][...]
        b = wb[2 * li + 1][...]
        t = jnp.dot(h, w, preferred_element_type=jnp.float32)   # X @ W (f32 acc)
        out = jnp.dot(a, t.astype(jnp.bfloat16),
                      preferred_element_type=jnp.float32) + b   # A @ H + b
        if li < num_layers - 1:
            out = jnp.maximum(out, 0.0)             # ReLU (dropout p=0 -> id)
            h = out.astype(jnp.bfloat16)
    o_ref[...] = out.astype(o_ref.dtype)


def fused_stack(adj_bf16, x_bf16, padded_params, out_c_pad):
    n_pad = adj_bf16.shape[0]
    num_layers = len(padded_params)

    inputs = [adj_bf16, x_bf16]
    in_specs = [
        pl.BlockSpec((n_pad, n_pad), lambda i: (0, 0)),
        pl.BlockSpec(x_bf16.shape, lambda i: (0, 0)),
    ]
    flops = 0
    bytes_accessed = adj_bf16.size * 2 + x_bf16.size * 2
    for w_p, b_p in padded_params:
        inputs.extend([w_p, b_p])
        in_specs.append(pl.BlockSpec(w_p.shape, lambda i: (0, 0)))
        in_specs.append(pl.BlockSpec(b_p.shape, lambda i: (0, 0)))
        c_in_p, c_out_p = w_p.shape
        flops += 2 * n_pad * c_in_p * c_out_p + 2 * n_pad * n_pad * c_out_p
        bytes_accessed += w_p.size * 2 + b_p.size * 4
    bytes_accessed += n_pad * out_c_pad * 4

    return pl.pallas_call(
        functools.partial(_fused_stack_kernel, num_layers=num_layers),
        out_shape=jax.ShapeDtypeStruct((n_pad, out_c_pad), jnp.float32),
        grid=(1,),
        in_specs=in_specs,
        out_specs=pl.BlockSpec((n_pad, out_c_pad), lambda i: (0, 0)),
        compiler_params=pltpu.CompilerParams(
            dimension_semantics=("arbitrary",)),
        cost_estimate=pl.CostEstimate(flops=flops, transcendentals=0,
                                      bytes_accessed=bytes_accessed),
    )(*inputs)


# ------- Fallback path, kernel 1: feature transform  H = X @ W ---------------
def _transform_kernel(x_ref, w_ref, h_ref):
    h = jnp.dot(x_ref[...], w_ref[...], preferred_element_type=jnp.float32)
    h_ref[...] = h.astype(h_ref.dtype)


def feature_transform(x_bf16, w_bf16, *, tm):
    """Row-tiled X @ W, bf16 in / bf16 out (f32 accumulation on the MXU)."""
    n_pad, c_in = x_bf16.shape
    c_out = w_bf16.shape[1]
    cost = pl.CostEstimate(
        flops=2 * n_pad * c_in * c_out,
        transcendentals=0,
        bytes_accessed=2 * (n_pad * c_in + c_in * c_out + n_pad * c_out),
    )
    return pl.pallas_call(
        _transform_kernel,
        out_shape=jax.ShapeDtypeStruct((n_pad, c_out), jnp.bfloat16),
        grid=(n_pad // tm,),
        in_specs=[
            pl.BlockSpec((tm, c_in), lambda i: (i, 0)),      # X row slab
            pl.BlockSpec((c_in, c_out), lambda i: (0, 0)),   # W (VMEM resident)
        ],
        out_specs=pl.BlockSpec((tm, c_out), lambda i: (i, 0)),
        compiler_params=pltpu.CompilerParams(
            dimension_semantics=("parallel",)),
        cost_estimate=cost,
    )(x_bf16, w_bf16)


# ------- Fallback path, kernel 2: aggregation  relu?(A @ H + b) --------------
def _aggregate_kernel(a_ref, h_ref, b_ref, o_ref, acc_ref, *, apply_relu):
    @pl.when(pl.program_id(2) == 0)
    def _():
        acc_ref[...] = jnp.zeros_like(acc_ref)

    acc_ref[...] += jnp.dot(a_ref[...], h_ref[...],
                            preferred_element_type=jnp.float32)

    @pl.when(pl.program_id(2) == pl.num_programs(2) - 1)
    def _():
        out = acc_ref[...] + b_ref[...]          # f32 bias broadcast
        if apply_relu:
            out = jnp.maximum(out, 0.0)
        o_ref[...] = out.astype(o_ref.dtype)


def aggregate(adj_bf16, h_bf16, b_f32, *, apply_relu, out_dtype, tm, tn, tk):
    """Tiled  out = relu?(A @ H + b)  with an f32 VMEM accumulator."""
    n_pad = adj_bf16.shape[0]
    c_out = h_bf16.shape[1]
    kernel = functools.partial(_aggregate_kernel, apply_relu=apply_relu)
    cost = pl.CostEstimate(
        flops=2 * n_pad * n_pad * c_out,
        transcendentals=0,
        bytes_accessed=(2 * n_pad * n_pad          # A (bf16)
                        + 2 * n_pad * c_out        # H (bf16)
                        + 4 * c_out                # bias (f32)
                        + 4 * n_pad * c_out),      # out (<= f32)
    )
    return pl.pallas_call(
        kernel,
        out_shape=jax.ShapeDtypeStruct((n_pad, c_out), out_dtype),
        grid=(n_pad // tm, c_out // tn, n_pad // tk),
        in_specs=[
            pl.BlockSpec((tm, tk), lambda i, j, k: (i, k)),   # A tile
            pl.BlockSpec((tk, tn), lambda i, j, k: (k, j)),   # H tile
            pl.BlockSpec((1, tn), lambda i, j, k: (0, j)),    # bias tile
        ],
        out_specs=pl.BlockSpec((tm, tn), lambda i, j, k: (i, j)),
        scratch_shapes=[pltpu.VMEM((tm, tn), jnp.float32)],
        compiler_params=pltpu.CompilerParams(
            dimension_semantics=("parallel", "parallel", "arbitrary")),
        cost_estimate=cost,
    )(adj_bf16, h_bf16, b_f32)


# ------------------------------ glue (plain JAX) -----------------------------
def build_dense_adjacency(edge_index, edge_weight, num_nodes_pad):
    """A_w[dst, src] += w  (messages flow src -> dst), padded, bf16."""
    src = edge_index[0]
    dst = edge_index[1]
    adj = jnp.zeros((num_nodes_pad, num_nodes_pad), jnp.float32)
    adj = adj.at[dst, src].add(edge_weight.astype(jnp.float32))
    return adj.astype(jnp.bfloat16)


def init_gmfb_params(key, in_channels, hidden_channels, out_channels,
                     num_layers=2):
    """Deterministic glorot-uniform weights + zero biases per GMFBConv."""
    dims = [in_channels] + [hidden_channels] * (num_layers - 1) + [out_channels]
    params = []
    for i in range(num_layers):
        key, sub = jax.random.split(key)
        fan_in, fan_out = dims[i], dims[i + 1]
        limit = (6.0 / (fan_in + fan_out)) ** 0.5
        w = jax.random.uniform(sub, (fan_in, fan_out), jnp.float32,
                               -limit, limit)
        b = jnp.zeros((1, fan_out), jnp.float32)
        params.append((w, b))
    return params


def gmfb_forward(params, x, edge_index, edge_weight, node_type=None):
    """Mirrors GMFB.forward.  node_type unused; dropout p=0.0 -> identity."""
    del node_type
    num_nodes, in_channels = x.shape
    out_channels = params[-1][0].shape[1]
    num_layers = len(params)

    n_pad = max(_round_up(num_nodes, 128), 128)
    adj = build_dense_adjacency(edge_index, edge_weight, n_pad)

    # Padded channel dims per layer boundary (zero padding is semantics-safe:
    # padded adjacency rows/cols are zero so padded nodes never leak into
    # real-node outputs).
    dims = [params[0][0].shape[0]] + [w.shape[1] for (w, _) in params]
    dims_p = [_round_up(d, 128) for d in dims]

    x_p = jnp.zeros((n_pad, dims_p[0]), jnp.bfloat16)
    x_p = x_p.at[:num_nodes, :in_channels].set(x.astype(jnp.bfloat16))

    padded_params = []
    for li, (w, b) in enumerate(params):
        c_in, c_out = w.shape
        w_p = jnp.zeros((dims_p[li], dims_p[li + 1]), jnp.bfloat16)
        w_p = w_p.at[:c_in, :c_out].set(w.astype(jnp.bfloat16))
        b_p = jnp.zeros((1, dims_p[li + 1]), jnp.float32)
        b_p = b_p.at[:, :c_out].set(b.astype(jnp.float32).reshape(1, -1))
        padded_params.append((w_p, b_p))

    if _small_path_vmem_bytes(n_pad, dims_p) <= _SMALL_PATH_VMEM_BUDGET:
        # Whole stack in one pallas_call: no HBM round-trips for H, one launch.
        out = fused_stack(adj, x_p, padded_params, dims_p[-1])
    else:
        # Large graphs: hoisted transform + tiled aggregation per layer.
        tm = _pick_tile(n_pad)
        tk = _pick_tile(n_pad)
        h = x_p
        for li, (w_p, b_p) in enumerate(padded_params):
            h_t = feature_transform(h, w_p, tm=tm)
            last = li == num_layers - 1
            tn = _pick_tile(dims_p[li + 1])
            out_dtype = jnp.float32 if last else jnp.bfloat16
            h = aggregate(adj, h_t, b_p, apply_relu=not last,
                          out_dtype=out_dtype, tm=tm, tn=tn, tk=tk)
        out = h

    return out[:num_nodes, :out_channels]


# ----------------------------------- main ------------------------------------
if __name__ == "__main__":
    key = jax.random.PRNGKey(0)

    num_nodes = 16
    in_channels = 8
    hidden_channels = 32
    out_channels = 16
    num_layers = 2
    num_edges = 40

    k_x, k_src, k_dst, k_w, k_p = jax.random.split(key, 5)
    x = jax.random.normal(k_x, (num_nodes, in_channels), jnp.float32)
    src = jax.random.randint(k_src, (num_edges,), 0, num_nodes)
    dst = jax.random.randint(k_dst, (num_edges,), 0, num_nodes)
    edge_index = jnp.stack([src, dst], axis=0)              # [2, E]
    edge_weight = jax.random.uniform(k_w, (num_edges,), jnp.float32)
    node_type = jnp.zeros((num_nodes,), jnp.int32)          # unused in forward

    params = init_gmfb_params(k_p, in_channels, hidden_channels, out_channels,
                              num_layers=num_layers)

    out = gmfb_forward(params, x, edge_index, edge_weight, node_type)
    jax.block_until_ready(out)
    assert out.shape == (num_nodes, out_channels)
    assert bool(jnp.all(jnp.isfinite(out)))
    print("KERNEL_OK")
</pallas_src>

<mosaic_0001>
module attributes {stable_mosaic.version = 11 : i64} {
  func.func @_fused_stack_kernel(%arg0: i32, %arg1: memref<128x128xbf16, #tpu.memory_space<vmem>>, %arg2: memref<128x128xbf16, #tpu.memory_space<vmem>>, %arg3: memref<128x128xbf16, #tpu.memory_space<vmem>>, %arg4: memref<1x128xf32, #tpu.memory_space<vmem>>, %arg5: memref<128x128xbf16, #tpu.memory_space<vmem>>, %arg6: memref<1x128xf32, #tpu.memory_space<vmem>>, %arg7: memref<128x128xf32, #tpu.memory_space<vmem>>) attributes {dimension_semantics = [#tpu.dimension_semantics<arbitrary>], iteration_bounds = array<i64: 1>, scalar_prefetch = 0 : i64, scratch_operands = 0 : i64, tpu.core_type = #tpu.core_type<tc>, window_params = [{pipeline_mode = #tpu.pipeline_mode<synchronous>, transform_indices = @transform_0, window_bounds = array<i64: 128, 128>}, {pipeline_mode = #tpu.pipeline_mode<synchronous>, transform_indices = @transform_1, window_bounds = array<i64: 128, 128>}, {pipeline_mode = #tpu.pipeline_mode<synchronous>, transform_indices = @transform_2, window_bounds = array<i64: 128, 128>}, {pipeline_mode = #tpu.pipeline_mode<synchronous>, transform_indices = @transform_3, window_bounds = array<i64: 1, 128>}, {pipeline_mode = #tpu.pipeline_mode<synchronous>, transform_indices = @transform_4, window_bounds = array<i64: 128, 128>}, {pipeline_mode = #tpu.pipeline_mode<synchronous>, transform_indices = @transform_5, window_bounds = array<i64: 1, 128>}, {pipeline_mode = #tpu.pipeline_mode<synchronous>, transform_indices = @transform_6, window_bounds = array<i64: 128, 128>}]} {
    %c0 = arith.constant 0 : index
    %c0_0 = arith.constant 0 : index
    %0 = vector.load %arg1[%c0, %c0_0] : memref<128x128xbf16, #tpu.memory_space<vmem>>, vector<128x128xbf16>
    %c0_1 = arith.constant 0 : index
    %c0_2 = arith.constant 0 : index
    %1 = vector.load %arg2[%c0_1, %c0_2] : memref<128x128xbf16, #tpu.memory_space<vmem>>, vector<128x128xbf16>
    %c0_3 = arith.constant 0 : index
    %c0_4 = arith.constant 0 : index
    %2 = vector.load %arg3[%c0_3, %c0_4] : memref<128x128xbf16, #tpu.memory_space<vmem>>, vector<128x128xbf16>
    %c0_5 = arith.constant 0 : index
    %c0_6 = arith.constant 0 : index
    %3 = vector.load %arg4[%c0_5, %c0_6] : memref<1x128xf32, #tpu.memory_space<vmem>>, vector<1x128xf32>
    %cst = arith.constant dense<0.000000e+00> : vector<128x128xf32>
    %4 = tpu.matmul %1, %2, %cst {dimension_numbers = #tpu.dot_dimension_numbers<[1], [0], [0], [1], [0, 0, 1, 1], [], []>} : vector<128x128xbf16>, vector<128x128xbf16>, vector<128x128xf32> -> vector<128x128xf32>
    %5 = arith.truncf %4 : vector<128x128xf32> to vector<128x128xbf16>
    %cst_7 = arith.constant dense<0.000000e+00> : vector<128x128xf32>
    %6 = tpu.matmul %0, %5, %cst_7 {dimension_numbers = #tpu.dot_dimension_numbers<[1], [0], [0], [1], [0, 0, 1, 1], [], []>} : vector<128x128xbf16>, vector<128x128xbf16>, vector<128x128xf32> -> vector<128x128xf32>
    %7 = vector.broadcast %3 : vector<1x128xf32> to vector<128x128xf32>
    %8 = arith.addf %6, %7 : vector<128x128xf32>
    %cst_8 = arith.constant 0.000000e+00 : f32
    %9 = vector.broadcast %cst_8 : f32 to vector<128x128xf32>
    %10 = arith.maximumf %8, %9 : vector<128x128xf32>
    %11 = arith.truncf %10 : vector<128x128xf32> to vector<128x128xbf16>
    %c0_9 = arith.constant 0 : index
    %c0_10 = arith.constant 0 : index
    %12 = vector.load %arg5[%c0_9, %c0_10] : memref<128x128xbf16, #tpu.memory_space<vmem>>, vector<128x128xbf16>
    %c0_11 = arith.constant 0 : index
    %c0_12 = arith.constant 0 : index
    %13 = vector.load %arg6[%c0_11, %c0_12] : memref<1x128xf32, #tpu.memory_space<vmem>>, vector<1x128xf32>
    %cst_13 = arith.constant dense<0.000000e+00> : vector<128x128xf32>
    %14 = tpu.matmul %11, %12, %cst_13 {dimension_numbers = #tpu.dot_dimension_numbers<[1], [0], [0], [1], [0, 0, 1, 1], [], []>} : vector<128x128xbf16>, vector<128x128xbf16>, vector<128x128xf32> -> vector<128x128xf32>
    %15 = arith.truncf %14 : vector<128x128xf32> to vector<128x128xbf16>
    %cst_14 = arith.constant dense<0.000000e+00> : vector<128x128xf32>
    %16 = tpu.matmul %0, %15, %cst_14 {dimension_numbers = #tpu.dot_dimension_numbers<[1], [0], [0], [1], [0, 0, 1, 1], [], []>} : vector<128x128xbf16>, vector<128x128xbf16>, vector<128x128xf32> -> vector<128x128xf32>
    %17 = vector.broadcast %13 : vector<1x128xf32> to vector<128x128xf32>
    %18 = arith.addf %16, %17 : vector<128x128xf32>
    %c0_15 = arith.constant 0 : index
    %c0_16 = arith.constant 0 : index
    %19 = vector.load %arg7[%c0_15, %c0_16] : memref<128x128xf32, #tpu.memory_space<vmem>>, vector<128x128xf32>
    tpu.vector_store %arg7[%c0_15, %c0_16], %18 {strides = array<i32>} : memref<128x128xf32, #tpu.memory_space<vmem>>, vector<128x128xf32>,
    return
  }
  func.func @transform_0(%arg0: i32) -> (i32, i32) {
    %c0_i32 = arith.constant 0 : i32
    %c0_i32_0 = arith.constant 0 : i32
    %c0_i32_1 = arith.constant 0 : i32
    return %c0_i32, %c0_i32_0 : i32, i32
  }
  func.func @transform_1(%arg0: i32) -> (i32, i32) {
    %c0_i32 = arith.constant 0 : i32
    %c0_i32_0 = arith.constant 0 : i32
    %c0_i32_1 = arith.constant 0 : i32
    return %c0_i32, %c0_i32_0 : i32, i32
  }
  func.func @transform_2(%arg0: i32) -> (i32, i32) {
    %c0_i32 = arith.constant 0 : i32
    %c0_i32_0 = arith.constant 0 : i32
    %c0_i32_1 = arith.constant 0 : i32
    return %c0_i32, %c0_i32_0 : i32, i32
  }
  func.func @transform_3(%arg0: i32) -> (i32, i32) {
    %c0_i32 = arith.constant 0 : i32
    %c0_i32_0 = arith.constant 0 : i32
    %c0_i32_1 = arith.constant 0 : i32
    return %c0_i32, %c0_i32_0 : i32, i32
  }
  func.func @transform_4(%arg0: i32) -> (i32, i32) {
    %c0_i32 = arith.constant 0 : i32
    %c0_i32_0 = arith.constant 0 : i32
    %c0_i32_1 = arith.constant 0 : i32
    return %c0_i32, %c0_i32_0 : i32, i32
  }
  func.func @transform_5(%arg0: i32) -> (i32, i32) {
    %c0_i32 = arith.constant 0 : i32
    %c0_i32_0 = arith.constant 0 : i32
    %c0_i32_1 = arith.constant 0 : i32
    return %c0_i32, %c0_i32_0 : i32, i32
  }
  func.func @transform_6(%arg0: i32) -> (i32, i32) {
    %c0_i32 = arith.constant 0 : i32
    %c0_i32_0 = arith.constant 0 : i32
    %c0_i32_1 = arith.constant 0 : i32
    return %c0_i32, %c0_i32_0 : i32, i32
  }
}

</mosaic_0001>

<llo_original>
// kernel: tpu_custom_call.1
$region0: #{tpu_custom_call.1}
  #allocation0 [shape = 'u32[]', space=smem, size = 0x4, offset = 0x4, fixed_abs, tag = 'smem constant byte address 0x4 - core index']
  #allocation1 [shape = 'u32[72,128]{1,0:T(1,128)}', space=vmem, size = 0x9000, scoped, tag = 'internal scratch']
  %s0 = inlined_call_operand.hbm [shape: bf16[128,128], index: 0, kind: input, shape index: {}]
  %s1 = inlined_call_operand.hbm [shape: bf16[128,128], index: 1, kind: input, shape index: {}]
  %s2 = inlined_call_operand.hbm [shape: bf16[128,128], index: 2, kind: input, shape index: {}]
  %s3 = inlined_call_operand.vmem [shape: f32[1,128], index: 3, kind: input, shape index: {}]
  %s4 = inlined_call_operand.hbm [shape: bf16[128,128], index: 4, kind: input, shape index: {}]
  %s5 = inlined_call_operand.vmem [shape: f32[1,128], index: 5, kind: input, shape index: {}]
  %s6 = inlined_call_operand.hbm [shape: f32[128,128], index: 6, kind: output, shape index: {}]
  %s7 = sld [smem:[#allocation0]]
  $region50: #{tpu_custom_call.1} parent=0
    _
  %s9 = ssub.s32 1, %s7
  %s10 = scalar_select 0, %s9, %s7
  $region1: #{tpu_custom_call.1} parent=0
    #allocation2 [shape = 'u8[32768]{0}', space=vmem, size = 0x8000, scoped, tag = 'input window, operand 0, single buffered']
    #allocation3 [shape = 's32[1]{0}', space=sflag, size = 0x4, scoped, tag = 'scoped memory for tpu_custom_call.1']
    #allocation4 [shape = 's32[1]{0}', space=sflag, size = 0x4, scoped, tag = 'scoped memory for tpu_custom_call.1']
    #allocation5 [shape = 'u8[32768]{0}', space=vmem, size = 0x8000, scoped, tag = 'input window, operand 1, single buffered']
    #allocation6 [shape = 's32[1]{0}', space=sflag, size = 0x4, scoped, tag = 'scoped memory for tpu_custom_call.1']
    #allocation7 [shape = 'u8[32768]{0}', space=vmem, size = 0x8000, scoped, tag = 'input window, operand 2, single buffered']
    #allocation8 [shape = 'u8[32768]{0}', space=vmem, size = 0x8000, scoped, tag = 'input window, operand 4, single buffered']
    #allocation9 [shape = 's32[1]{0}', space=sflag, size = 0x4, scoped, tag = 'scoped memory for tpu_custom_call.1']
    #allocation10 [shape = 'u8[65536]{0}', space=vmem, size = 0x10000, scoped, tag = 'output window, operand 0, single buffered']
    %11 = vsyncpa [#allocation3], 0
    %12 = vsyncpa [#allocation6], 0
    %13 = vsyncpa [#allocation9], 0
    %14 = vsyncpa [#allocation4], 0
    // Predicated region
    $region2: #{tpu_custom_call.1} parent=1 // pred_check
      _
    $region3: #{tpu_custom_call.1} parent=1 // pred_check_branch
      %16 = sbr.rel (0) target = $region5
    $region4: #{tpu_custom_call.1} parent=1 // pred_region
      %18 = vsyncadd [#allocation3], 0
      %s19 = sshll.u32 %s0, 4
      %s20 = int_to_ptr.hbm [resolvable:$true] %s19
      %s21 = sshll.u32 [#allocation2], 4
      %s22 = int_to_ptr.vmem [resolvable:$true] %s21
      %27 = dma.hbm_to_vmem [thread:$0]  %s20, 1024, %s22, [#allocation3], 64, 64, 4
    $region5: #{tpu_custom_call.1} parent=1 // pred_fallthru
      _
    // Predicated region
    $region6: #{tpu_custom_call.1} parent=1 // pred_check
      _
    $region7: #{tpu_custom_call.1} parent=1 // pred_check_branch
      %29 = sbr.rel (0) target = $region9
    $region8: #{tpu_custom_call.1} parent=1 // pred_region
      %31 = vsyncadd [#allocation6], 0
      %s32 = sshll.u32 %s1, 4
      %s33 = int_to_ptr.hbm [resolvable:$true] %s32
      %s34 = sshll.u32 [#allocation5], 4
      %s35 = int_to_ptr.vmem [resolvable:$true] %s34
      %40 = dma.hbm_to_vmem [thread:$0]  %s33, 1024, %s35, [#allocation6], 64, 64, 4
    $region9: #{tpu_custom_call.1} parent=1 // pred_fallthru
      _
    // Predicated region
    $region10: #{tpu_custom_call.1} parent=1 // pred_check
      _
    $region11: #{tpu_custom_call.1} parent=1 // pred_check_branch
      %42 = sbr.rel (0) target = $region13
    $region12: #{tpu_custom_call.1} parent=1 // pred_region
      %44 = vsyncadd [#allocation6], 0
      %s45 = sshll.u32 %s2, 4
      %s46 = int_to_ptr.hbm [resolvable:$true] %s45
      %s47 = sshll.u32 [#allocation7], 4
      %s48 = int_to_ptr.vmem [resolvable:$true] %s47
      %53 = dma.hbm_to_vmem [thread:$0]  %s46, 1024, %s48, [#allocation6], 64, 64, 4
    $region13: #{tpu_custom_call.1} parent=1 // pred_fallthru
      _
    // Predicated region
    $region14: #{tpu_custom_call.1} parent=1 // pred_check
      _
    $region15: #{tpu_custom_call.1} parent=1 // pred_check_branch
      %55 = sbr.rel (0) target = $region17
    $region16: #{tpu_custom_call.1} parent=1 // pred_region
      _
    $region17: #{tpu_custom_call.1} parent=1 // pred_fallthru
      _
    // Predicated region
    $region18: #{tpu_custom_call.1} parent=1 // pred_check
      _
    $region19: #{tpu_custom_call.1} parent=1 // pred_check_branch
      %57 = sbr.rel (0) target = $region21
    $region20: #{tpu_custom_call.1} parent=1 // pred_region
      %59 = vsyncadd [#allocation9], 0
      %s60 = sshll.u32 %s4, 4
      %s61 = int_to_ptr.hbm [resolvable:$true] %s60
      %s62 = sshll.u32 [#allocation8], 4
      %s63 = int_to_ptr.vmem [resolvable:$true] %s62
      %68 = dma.hbm_to_vmem [thread:$0]  %s61, 1024, %s63, [#allocation9], 64, 64, 4
    $region21: #{tpu_custom_call.1} parent=1 // pred_fallthru
      _
    // Predicated region
    $region22: #{tpu_custom_call.1} parent=1 // pred_check
      _
    $region23: #{tpu_custom_call.1} parent=1 // pred_check_branch
      %70 = sbr.rel (0) target = $region25
    $region24: #{tpu_custom_call.1} parent=1 // pred_region
      _
    $region25: #{tpu_custom_call.1} parent=1 // pred_fallthru
      _
    // Predicated region
    $region26: #{tpu_custom_call.1} parent=1 // pred_check
      _
    $region27: #{tpu_custom_call.1} parent=1 // pred_check_branch
      %72 = sbr.rel (0) target = $region29
    $region28: #{tpu_custom_call.1} parent=1 // pred_region
      %74 = dma.done [#allocation3], 1024
    $region29: #{tpu_custom_call.1} parent=1 // pred_fallthru
      _
    // Predicated region
    $region30: #{tpu_custom_call.1} parent=1 // pred_check
      _
    $region31: #{tpu_custom_call.1} parent=1 // pred_check_branch
      %76 = sbr.rel (0) target = $region33
    $region32: #{tpu_custom_call.1} parent=1 // pred_region
      %78 = dma.done [#allocation6], 1024
    $region33: #{tpu_custom_call.1} parent=1 // pred_fallthru
      _
    // Predicated region
    $region34: #{tpu_custom_call.1} parent=1 // pred_check
      _
    $region35: #{tpu_custom_call.1} parent=1 // pred_check_branch
      %80 = sbr.rel (0) target = $region37
    $region36: #{tpu_custom_call.1} parent=1 // pred_region
      %82 = dma.done [#allocation6], 1024
    $region37: #{tpu_custom_call.1} parent=1 // pred_fallthru
      _
    // Predicated region
    $region38: #{tpu_custom_call.1} parent=1 // pred_check
      _
    $region39: #{tpu_custom_call.1} parent=1 // pred_check_branch
      %84 = sbr.rel (0) target = $region41
    $region40: #{tpu_custom_call.1} parent=1 // pred_region
      %86 = dma.done [#allocation9], 1024
    $region41: #{tpu_custom_call.1} parent=1 // pred_fallthru
      _
    %v87 = vld [vmem:[#allocation2] sm:$0xf]
    %v88 = vld [vmem:[#allocation2 + $0x4] sm:$0xf]
    %v89 = vld [vmem:[#allocation2 + $0x8] sm:$0xf]
    %v90 = vld [vmem:[#allocation2 + $0xc] sm:$0xf]
    %v91 = vld [vmem:[#allocation2 + $0x10] sm:$0xf]
    %v92 = vld [vmem:[#allocation2 + $0x14] sm:$0xf]
    %v93 = vld [vmem:[#allocation2 + $0x18] sm:$0xf]
    %v94 = vld [vmem:[#allocation2 + $0x1c] sm:$0xf]
    %v95 = vld [vmem:[#allocation2 + $0x20] sm:$0xf]
    %v96 = vld [vmem:[#allocation2 + $0x24] sm:$0xf]
    %v97 = vld [vmem:[#allocation2 + $0x28] sm:$0xf]
    %v98 = vld [vmem:[#allocation2 + $0x2c] sm:$0xf]
    %v99 = vld [vmem:[#allocation2 + $0x30] sm:$0xf]
    %v100 = vld [vmem:[#allocation2 + $0x34] sm:$0xf]
    %v101 = vld [vmem:[#allocation2 + $0x38] sm:$0xf]
    %v102 = vld [vmem:[#allocation2 + $0x3c] sm:$0xf]
    %v103 = vld [vmem:[#allocation5] sm:$0xf]
    %v104 = vld [vmem:[#allocation5 + $0x4] sm:$0xf]
    %v105 = vld [vmem:[#allocation5 + $0x8] sm:$0xf]
    %v106 = vld [vmem:[#allocation5 + $0xc] sm:$0xf]
    %v107 = vld [vmem:[#allocation5 + $0x10] sm:$0xf]
    %v108 = vld [vmem:[#allocation5 + $0x14] sm:$0xf]
    %v109 = vld [vmem:[#allocation5 + $0x18] sm:$0xf]
    %v110 = vld [vmem:[#allocation5 + $0x1c] sm:$0xf]
    %v111 = vld [vmem:[#allocation5 + $0x20] sm:$0xf]
    %v112 = vld [vmem:[#allocation5 + $0x24] sm:$0xf]
    %v113 = vld [vmem:[#allocation5 + $0x28] sm:$0xf]
    %v114 = vld [vmem:[#allocation5 + $0x2c] sm:$0xf]
    %v115 = vld [vmem:[#allocation5 + $0x30] sm:$0xf]
    %v116 = vld [vmem:[#allocation5 + $0x34] sm:$0xf]
    %v117 = vld [vmem:[#allocation5 + $0x38] sm:$0xf]
    %v118 = vld [vmem:[#allocation5 + $0x3c] sm:$0xf]
    %v119 = vld [vmem:[#allocation7] sm:$0xf]
    %v120 = vld [vmem:[#allocation7 + $0x4] sm:$0xf]
    %v121 = vld [vmem:[#allocation7 + $0x8] sm:$0xf]
    %v122 = vld [vmem:[#allocation7 + $0xc] sm:$0xf]
    %v123 = vld [vmem:[#allocation7 + $0x10] sm:$0xf]
    %v124 = vld [vmem:[#allocation7 + $0x14] sm:$0xf]
    %v125 = vld [vmem:[#allocation7 + $0x18] sm:$0xf]
    %v126 = vld [vmem:[#allocation7 + $0x1c] sm:$0xf]
    %v127 = vld [vmem:[#allocation7 + $0x20] sm:$0xf]
    %v128 = vld [vmem:[#allocation7 + $0x24] sm:$0xf]
    %v129 = vld [vmem:[#allocation7 + $0x28] sm:$0xf]
    %v130 = vld [vmem:[#allocation7 + $0x2c] sm:$0xf]
    %v131 = vld [vmem:[#allocation7 + $0x30] sm:$0xf]
    %v132 = vld [vmem:[#allocation7 + $0x34] sm:$0xf]
    %v133 = vld [vmem:[#allocation7 + $0x38] sm:$0xf]
    %v134 = vld [vmem:[#allocation7 + $0x3c] sm:$0xf]
    %v135 = vld [vmem:[%s3] sm:$0x1]
    %v152 = vunpack.c.l.b16 %v103
    %v153 = vunpack.c.l.b16 %v104
    %v154 = vunpack.c.l.b16 %v105
    %v155 = vunpack.c.l.b16 %v106
    %v156 = vunpack.c.l.b16 %v107
    %v157 = vunpack.c.l.b16 %v108
    %v158 = vunpack.c.l.b16 %v109
    %v159 = vunpack.c.l.b16 %v110
    %v160 = vunpack.c.l.b16 %v111
    %v161 = vunpack.c.l.b16 %v112
    %v162 = vunpack.c.l.b16 %v113
    %v163 = vunpack.c.l.b16 %v114
    %v164 = vunpack.c.l.b16 %v115
    %v165 = vunpack.c.l.b16 %v116
    %v166 = vunpack.c.l.b16 %v117
    %v167 = vunpack.c.l.b16 %v118
    %v168 = vpack.c.b16 %v153, %v152
    %v169 = vpack.c.b16 %v155, %v154
    %v170 = vpack.c.b16 %v157, %v156
    %v171 = vpack.c.b16 %v159, %v158
    %v172 = vpack.c.b16 %v161, %v160
    %v173 = vpack.c.b16 %v163, %v162
    %v174 = vpack.c.b16 %v165, %v164
    %v175 = vpack.c.b16 %v167, %v166
    %v200 = vunpack.c.l.b16 %v119
    %v201 = vunpack.c.l.b16 %v120
    %v202 = vunpack.c.l.b16 %v121
    %v203 = vunpack.c.l.b16 %v122
    %v204 = vunpack.c.l.b16 %v123
    %v205 = vunpack.c.l.b16 %v124
    %v206 = vunpack.c.l.b16 %v125
    %v207 = vunpack.c.l.b16 %v126
    %v208 = vunpack.c.l.b16 %v127
    %v209 = vunpack.c.l.b16 %v128
    %v210 = vunpack.c.l.b16 %v129
    %v211 = vunpack.c.l.b16 %v130
    %v212 = vunpack.c.l.b16 %v131
    %v213 = vunpack.c.l.b16 %v132
    %v214 = vunpack.c.l.b16 %v133
    %v215 = vunpack.c.l.b16 %v134
    %v216 = vpack.c.b16 %v201, %v200
    %v217 = vpack.c.b16 %v203, %v202
    %v218 = vpack.c.b16 %v205, %v204
    %v219 = vpack.c.b16 %v207, %v206
    %v220 = vpack.c.b16 %v209, %v208
    %v221 = vpack.c.b16 %v211, %v210
    %v222 = vpack.c.b16 %v213, %v212
    %v223 = vpack.c.b16 %v215, %v214
    %232 = vmatpush.bf16.msra.mxu0 %v223
    %233 = vmatpush.bf16.msra.mxu0 %v222
    %234 = vmatpush.bf16.msra.mxu0 %v221
    %235 = vmatpush.bf16.msra.mxu0 %v220
    %236 = vmatpush.bf16.msra.mxu0 %v219
    %237 = vmatpush.bf16.msra.mxu0 %v218
    %238 = vmatpush.bf16.msra.mxu0 %v217
    %239 = vmatpush.bf16.msra.mxu0 %v216
    %240 = vmatmul.bf16.gmra.mxu0 %v168
    %v241 = vpop.f32.mrf.mxu0
    %v242 = vadd.f32 0.0, %v241
    %v243 = vpop.f32.mrf.mxu0
    %v244 = vadd.f32 0.0, %v243
    %245 = vmatmul.bf16.gmra.mxu0 %v169
    %v246 = vpop.f32.mrf.mxu0
    %v247 = vadd.f32 0.0, %v246
    %v248 = vpop.f32.mrf.mxu0
    %v249 = vadd.f32 0.0, %v248
    %250 = vmatmul.bf16.gmra.mxu0 %v170
    %v251 = vpop.f32.mrf.mxu0
    %v252 = vadd.f32 0.0, %v251
    %v253 = vpop.f32.mrf.mxu0
    %v254 = vadd.f32 0.0, %v253
    %255 = vmatmul.bf16.gmra.mxu0 %v171
    %v256 = vpop.f32.mrf.mxu0
    %v257 = vadd.f32 0.0, %v256
    %v258 = vpop.f32.mrf.mxu0
    %v259 = vadd.f32 0.0, %v258
    %260 = vmatmul.bf16.gmra.mxu0 %v172
    %v261 = vpop.f32.mrf.mxu0
    %v262 = vadd.f32 0.0, %v261
    %v263 = vpop.f32.mrf.mxu0
    %v264 = vadd.f32 0.0, %v263
    %265 = vmatmul.bf16.gmra.mxu0 %v173
    %v266 = vpop.f32.mrf.mxu0
    %v267 = vadd.f32 0.0, %v266
    %v268 = vpop.f32.mrf.mxu0
    %v269 = vadd.f32 0.0, %v268
    %270 = vmatmul.bf16.gmra.mxu0 %v174
    %v271 = vpop.f32.mrf.mxu0
    %v272 = vadd.f32 0.0, %v271
    %v273 = vpop.f32.mrf.mxu0
    %v274 = vadd.f32 0.0, %v273
    %275 = vmatmul.bf16.gmra.mxu0 %v175
    %v276 = vpop.f32.mrf.mxu0
    %v277 = vadd.f32 0.0, %v276
    %v278 = vpop.f32.mrf.mxu0
    %v279 = vadd.f32 0.0, %v278
    %280 = vdwg.mxu0
    %v281 = vpack.c.bf16 %v244, %v242
    %v282 = vpack.c.bf16 %v249, %v247
    %v283 = vpack.c.bf16 %v254, %v252
    %v284 = vpack.c.bf16 %v259, %v257
    %v285 = vpack.c.bf16 %v264, %v262
    %v286 = vpack.c.bf16 %v269, %v267
    %v287 = vpack.c.bf16 %v274, %v272
    %v288 = vpack.c.bf16 %v279, %v277
    %v290 = vperm.slane %v135, 0
    %v308 = vunpack.c.l.b16 %v87
    %v309 = vunpack.c.l.b16 %v88
    %v310 = vunpack.c.l.b16 %v89
    %v311 = vunpack.c.l.b16 %v90
    %v312 = vunpack.c.l.b16 %v91
    %v313 = vunpack.c.l.b16 %v92
    %v314 = vunpack.c.l.b16 %v93
    %v315 = vunpack.c.l.b16 %v94
    %v316 = vunpack.c.l.b16 %v95
    %v317 = vunpack.c.l.b16 %v96
    %v318 = vunpack.c.l.b16 %v97
    %v319 = vunpack.c.l.b16 %v98
    %v320 = vunpack.c.l.b16 %v99
    %v321 = vunpack.c.l.b16 %v100
    %v322 = vunpack.c.l.b16 %v101
    %v323 = vunpack.c.l.b16 %v102
    %v324 = vpack.c.b16 %v309, %v308
    %v325 = vpack.c.b16 %v311, %v310
    %v326 = vpack.c.b16 %v313, %v312
    %v327 = vpack.c.b16 %v315, %v314
    %v328 = vpack.c.b16 %v317, %v316
    %v329 = vpack.c.b16 %v319, %v318
    %v330 = vpack.c.b16 %v321, %v320
    %v331 = vpack.c.b16 %v323, %v322
    %340 = vmatpush.bf16.msra.mxu0 %v288
    %341 = vmatpush.bf16.msra.mxu0 %v287
    %342 = vmatpush.bf16.msra.mxu0 %v286
    %343 = vmatpush.bf16.msra.mxu0 %v285
    %344 = vmatpush.bf16.msra.mxu0 %v284
    %345 = vmatpush.bf16.msra.mxu0 %v283
    %346 = vmatpush.bf16.msra.mxu0 %v282
    %347 = vmatpush.bf16.msra.mxu0 %v281
    %348 = vmatmul.bf16.gmra.mxu0 %v324
    %v349 = vpop.f32.mrf.mxu0
    %v350 = vadd.f32 %v290, %v349
    %v351 = vpop.f32.mrf.mxu0
    %v352 = vadd.f32 %v290, %v351
    %353 = vmatmul.bf16.gmra.mxu0 %v325
    %v354 = vpop.f32.mrf.mxu0
    %v355 = vadd.f32 %v290, %v354
    %v356 = vpop.f32.mrf.mxu0
    %v357 = vadd.f32 %v290, %v356
    %358 = vmatmul.bf16.gmra.mxu0 %v326
    %v359 = vpop.f32.mrf.mxu0
    %v360 = vadd.f32 %v290, %v359
    %v361 = vpop.f32.mrf.mxu0
    %v362 = vadd.f32 %v290, %v361
    %363 = vmatmul.bf16.gmra.mxu0 %v327
    %v364 = vpop.f32.mrf.mxu0
    %v365 = vadd.f32 %v290, %v364
    %v366 = vpop.f32.mrf.mxu0
    %v367 = vadd.f32 %v290, %v366
    %368 = vmatmul.bf16.gmra.mxu0 %v328
    %v369 = vpop.f32.mrf.mxu0
    %v370 = vadd.f32 %v290, %v369
    %v371 = vpop.f32.mrf.mxu0
    %v372 = vadd.f32 %v290, %v371
    %373 = vmatmul.bf16.gmra.mxu0 %v329
    %v374 = vpop.f32.mrf.mxu0
    %v375 = vadd.f32 %v290, %v374
    %v376 = vpop.f32.mrf.mxu0
    %v377 = vadd.f32 %v290, %v376
    %378 = vmatmul.bf16.gmra.mxu0 %v330
    %v379 = vpop.f32.mrf.mxu0
    %v380 = vadd.f32 %v290, %v379
    %v381 = vpop.f32.mrf.mxu0
    %v382 = vadd.f32 %v290, %v381
    %383 = vmatmul.bf16.gmra.mxu0 %v331
    %v384 = vpop.f32.mrf.mxu0
    %v385 = vadd.f32 %v290, %v384
    %v386 = vpop.f32.mrf.mxu0
    %v387 = vadd.f32 %v290, %v386
    %388 = vdwg.mxu0
    %v389 = vmax.f32 %v350, 0.0
    %v390 = vmax.f32 %v352, 0.0
    %v391 = vmax.f32 %v355, 0.0
    %v392 = vmax.f32 %v357, 0.0
    %v393 = vmax.f32 %v360, 0.0
    %v394 = vmax.f32 %v362, 0.0
    %v395 = vmax.f32 %v365, 0.0
    %v396 = vmax.f32 %v367, 0.0
    %v397 = vmax.f32 %v370, 0.0
    %v398 = vmax.f32 %v372, 0.0
    %v399 = vmax.f32 %v375, 0.0
    %v400 = vmax.f32 %v377, 0.0
    %v401 = vmax.f32 %v380, 0.0
    %v402 = vmax.f32 %v382, 0.0
    %v403 = vmax.f32 %v385, 0.0
    %v404 = vmax.f32 %v387, 0.0
    %v405 = vpack.c.bf16 %v390, %v389
    %v406 = vpack.c.bf16 %v392, %v391
    %v407 = vpack.c.bf16 %v394, %v393
    %v408 = vpack.c.bf16 %v396, %v395
    %v409 = vpack.c.bf16 %v398, %v397
    %v410 = vpack.c.bf16 %v400, %v399
    %v411 = vpack.c.bf16 %v402, %v401
    %v412 = vpack.c.bf16 %v404, %v403
    %v413 = vld [vmem:[#allocation8] sm:$0xf]
    %v414 = vld [vmem:[#allocation8 + $0x4] sm:$0xf]
    %v415 = vld [vmem:[#allocation8 + $0x8] sm:$0xf]
    %v416 = vld [vmem:[#allocation8 + $0xc] sm:$0xf]
    %v417 = vld [vmem:[#allocation8 + $0x10] sm:$0xf]
    %v418 = vld [vmem:[#allocation8 + $0x14] sm:$0xf]
    %v419 = vld [vmem:[#allocation8 + $0x18] sm:$0xf]
    %v420 = vld [vmem:[#allocation8 + $0x1c] sm:$0xf]
    %v421 = vld [vmem:[#allocation8 + $0x20] sm:$0xf]
    %v422 = vld [vmem:[#allocation8 + $0x24] sm:$0xf]
    %v423 = vld [vmem:[#allocation8 + $0x28] sm:$0xf]
    %v424 = vld [vmem:[#allocation8 + $0x2c] sm:$0xf]
    %v425 = vld [vmem:[#allocation8 + $0x30] sm:$0xf]
    %v426 = vld [vmem:[#allocation8 + $0x34] sm:$0xf]
    %v427 = vld [vmem:[#allocation8 + $0x38] sm:$0xf]
    %v428 = vld [vmem:[#allocation8 + $0x3c] sm:$0xf]
    %v429 = vld [vmem:[%s5] sm:$0x1]
    %v446 = vunpack.c.l.b16 %v413
    %v447 = vunpack.c.l.b16 %v414
    %v448 = vunpack.c.l.b16 %v415
    %v449 = vunpack.c.l.b16 %v416
    %v450 = vunpack.c.l.b16 %v417
    %v451 = vunpack.c.l.b16 %v418
    %v452 = vunpack.c.l.b16 %v419
    %v453 = vunpack.c.l.b16 %v420
    %v454 = vunpack.c.l.b16 %v421
    %v455 = vunpack.c.l.b16 %v422
    %v456 = vunpack.c.l.b16 %v423
    %v457 = vunpack.c.l.b16 %v424
    %v458 = vunpack.c.l.b16 %v425
    %v459 = vunpack.c.l.b16 %v426
    %v460 = vunpack.c.l.b16 %v427
    %v461 = vunpack.c.l.b16 %v428
    %v462 = vpack.c.b16 %v447, %v446
    %v463 = vpack.c.b16 %v449, %v448
    %v464 = vpack.c.b16 %v451, %v450
    %v465 = vpack.c.b16 %v453, %v452
    %v466 = vpack.c.b16 %v455, %v454
    %v467 = vpack.c.b16 %v457, %v456
    %v468 = vpack.c.b16 %v459, %v458
    %v469 = vpack.c.b16 %v461, %v460
    %478 = vmatpush.bf16.msra.mxu0 %v469
    %479 = vmatpush.bf16.msra.mxu0 %v468
    %480 = vmatpush.bf16.msra.mxu0 %v467
    %481 = vmatpush.bf16.msra.mxu0 %v466
    %482 = vmatpush.bf16.msra.mxu0 %v465
    %483 = vmatpush.bf16.msra.mxu0 %v464
    %484 = vmatpush.bf16.msra.mxu0 %v463
    %485 = vmatpush.bf16.msra.mxu0 %v462
    %486 = vmatmul.bf16.gmra.mxu0 %v405
    %v487 = vpop.f32.mrf.mxu0
    %v488 = vadd.f32 0.0, %v487
    %v489 = vpop.f32.mrf.mxu0
    %v490 = vadd.f32 0.0, %v489
    %491 = vmatmul.bf16.gmra.mxu0 %v406
    %v492 = vpop.f32.mrf.mxu0
    %v493 = vadd.f32 0.0, %v492
    %v494 = vpop.f32.mrf.mxu0
    %v495 = vadd.f32 0.0, %v494
    %496 = vmatmul.bf16.gmra.mxu0 %v407
    %v497 = vpop.f32.mrf.mxu0
    %v498 = vadd.f32 0.0, %v497
    %v499 = vpop.f32.mrf.mxu0
    %v500 = vadd.f32 0.0, %v499
    %501 = vmatmul.bf16.gmra.mxu0 %v408
    %v502 = vpop.f32.mrf.mxu0
    %v503 = vadd.f32 0.0, %v502
    %v504 = vpop.f32.mrf.mxu0
    %v505 = vadd.f32 0.0, %v504
    %506 = vmatmul.bf16.gmra.mxu0 %v409
    %v507 = vpop.f32.mrf.mxu0
    %v508 = vadd.f32 0.0, %v507
    %v509 = vpop.f32.mrf.mxu0
    %v510 = vadd.f32 0.0, %v509
    %511 = vmatmul.bf16.gmra.mxu0 %v410
    %v512 = vpop.f32.mrf.mxu0
    %v513 = vadd.f32 0.0, %v512
    %v514 = vpop.f32.mrf.mxu0
    %v515 = vadd.f32 0.0, %v514
    %516 = vmatmul.bf16.gmra.mxu0 %v411
    %v517 = vpop.f32.mrf.mxu0
    %v518 = vadd.f32 0.0, %v517
    %v519 = vpop.f32.mrf.mxu0
    %v520 = vadd.f32 0.0, %v519
    %521 = vmatmul.bf16.gmra.mxu0 %v412
    %v522 = vpop.f32.mrf.mxu0
    %v523 = vadd.f32 0.0, %v522
    %v524 = vpop.f32.mrf.mxu0
    %v525 = vadd.f32 0.0, %v524
    %526 = vdwg.mxu0
    %v527 = vpack.c.bf16 %v490, %v488
    %v528 = vpack.c.bf16 %v495, %v493
    %v529 = vpack.c.bf16 %v500, %v498
    %v530 = vpack.c.bf16 %v505, %v503
    %v531 = vpack.c.bf16 %v510, %v508
    %v532 = vpack.c.bf16 %v515, %v513
    %v533 = vpack.c.bf16 %v520, %v518
    %v534 = vpack.c.bf16 %v525, %v523
    %v536 = vperm.slane %v429, 0
    %538 = vmatpush.bf16.msra.mxu0 %v534
    %539 = vmatpush.bf16.msra.mxu0 %v533
    %540 = vmatpush.bf16.msra.mxu0 %v532
    %541 = vmatpush.bf16.msra.mxu0 %v531
    %542 = vmatpush.bf16.msra.mxu0 %v530
    %543 = vmatpush.bf16.msra.mxu0 %v529
    %544 = vmatpush.bf16.msra.mxu0 %v528
    %545 = vmatpush.bf16.msra.mxu0 %v527
    %546 = vmatmul.bf16.gmra.mxu0 %v324
    %v547 = vpop.f32.mrf.mxu0
    %v548 = vadd.f32 %v536, %v547
    %v549 = vpop.f32.mrf.mxu0
    %v550 = vadd.f32 %v536, %v549
    %551 = vmatmul.bf16.gmra.mxu0 %v325
    %v552 = vpop.f32.mrf.mxu0
    %v553 = vadd.f32 %v536, %v552
    %v554 = vpop.f32.mrf.mxu0
    %v555 = vadd.f32 %v536, %v554
    %556 = vmatmul.bf16.gmra.mxu0 %v326
    %v557 = vpop.f32.mrf.mxu0
    %v558 = vadd.f32 %v536, %v557
    %v559 = vpop.f32.mrf.mxu0
    %v560 = vadd.f32 %v536, %v559
    %561 = vmatmul.bf16.gmra.mxu0 %v327
    %v562 = vpop.f32.mrf.mxu0
    %v563 = vadd.f32 %v536, %v562
    %v564 = vpop.f32.mrf.mxu0
    %v565 = vadd.f32 %v536, %v564
    %566 = vmatmul.bf16.gmra.mxu0 %v328
    %v567 = vpop.f32.mrf.mxu0
    %v568 = vadd.f32 %v536, %v567
    %v569 = vpop.f32.mrf.mxu0
    %v570 = vadd.f32 %v536, %v569
    %571 = vmatmul.bf16.gmra.mxu0 %v329
    %v572 = vpop.f32.mrf.mxu0
    %v573 = vadd.f32 %v536, %v572
    %v574 = vpop.f32.mrf.mxu0
    %v575 = vadd.f32 %v536, %v574
    %576 = vmatmul.bf16.gmra.mxu0 %v330
    %v577 = vpop.f32.mrf.mxu0
    %v578 = vadd.f32 %v536, %v577
    %v579 = vpop.f32.mrf.mxu0
    %v580 = vadd.f32 %v536, %v579
    %581 = vmatmul.bf16.gmra.mxu0 %v331
    %v582 = vpop.f32.mrf.mxu0
    %v583 = vadd.f32 %v536, %v582
    %v584 = vpop.f32.mrf.mxu0
    %v585 = vadd.f32 %v536, %v584
    %586 = vdwg.mxu0
    %587 = vst [vmem:[#allocation10] sm:$0xff] %v548
    %588 = vst [vmem:[#allocation10 + $0x8] sm:$0xff] %v550
    %589 = vst [vmem:[#allocation10 + $0x10] sm:$0xff] %v553
    %590 = vst [vmem:[#allocation10 + $0x18] sm:$0xff] %v555
    %591 = vst [vmem:[#allocation10 + $0x20] sm:$0xff] %v558
    %592 = vst [vmem:[#allocation10 + $0x28] sm:$0xff] %v560
    %593 = vst [vmem:[#allocation10 + $0x30] sm:$0xff] %v563
    %594 = vst [vmem:[#allocation10 + $0x38] sm:$0xff] %v565
    %595 = vst [vmem:[#allocation10 + $0x40] sm:$0xff] %v568
    %596 = vst [vmem:[#allocation10 + $0x48] sm:$0xff] %v570
    %597 = vst [vmem:[#allocation10 + $0x50] sm:$0xff] %v573
    %598 = vst [vmem:[#allocation10 + $0x58] sm:$0xff] %v575
    %599 = vst [vmem:[#allocation10 + $0x60] sm:$0xff] %v578
    %600 = vst [vmem:[#allocation10 + $0x68] sm:$0xff] %v580
    %601 = vst [vmem:[#allocation10 + $0x70] sm:$0xff] %v583
    %602 = vst [vmem:[#allocation10 + $0x78] sm:$0xff] %v585
    // Predicated region
    $region42: #{tpu_custom_call.1} parent=1 // pred_check
      _
    $region43: #{tpu_custom_call.1} parent=1 // pred_check_branch
      %604 = sbr.rel (0) target = $region45
    $region44: #{tpu_custom_call.1} parent=1 // pred_region
      %606 = vsyncadd [#allocation4], 0
      %s607 = sshll.u32 [#allocation10], 4
      %s608 = int_to_ptr.vmem [resolvable:$true] %s607
      %s609 = sshll.u32 %s6, 4
      %s610 = int_to_ptr.hbm [resolvable:$true] %s609
      %615 = dma.vmem_to_hbm [thread:$0]  %s608, 2048, %s610, [#allocation4], 128, 128, 8
    $region45: #{tpu_custom_call.1} parent=1 // pred_fallthru
      _
    // Predicated region
    $region46: #{tpu_custom_call.1} parent=1 // pred_check
      _
    $region47: #{tpu_custom_call.1} parent=1 // pred_check_branch
      %617 = sbr.rel (0) target = $region49
    $region48: #{tpu_custom_call.1} parent=1 // pred_region
      %619 = dma.done [#allocation4], 2048
    $region49: #{tpu_custom_call.1} parent=1 // pred_fallthru
      _
    %620 = vsyncpa [#allocation3], 1
    %621 = vsyncpa [#allocation6], 1
    %622 = vsyncpa [#allocation9], 1
    %623 = vsyncpa [#allocation4], 1

</llo_original>
